<compile_context>
chip_gen: v7x
topology: tpu7x:2x2x1
jax: 0.10.0
libtpu: 0.0.40
codegen_flags: <defaults>
</compile_context>

<pallas_src>
import functools

import jax
import jax.numpy as jnp
from jax.experimental import pallas as pl
from jax.experimental.pallas import tpu as pltpu

HIDDEN = 256
LANE = 128
SUBLANE_BF16 = 16  # bf16 packs 16 rows per vreg sublane group


def _round_up(x, m):
    return ((x + m - 1) // m) * m


def _hex_policy_kernel(x_ref, w1_ref, b1_ref, w2_ref, b2_ref, w3_ref, b3_ref,
                       o_ref, *, bf16_epilogue):
    """Whole MLP for one batch tile: 3 bf16 MXU matmuls with f32 accumulation."""
    x = x_ref[...]  # (bt, board_dim) bf16

    h1 = jnp.dot(x, w1_ref[...], preferred_element_type=jnp.float32)
    if bf16_epilogue:
        # Single downcast of the accumulator, then packed bf16 bias-add + ReLU
        # (bf16 VALU on v6e/v7x) -> halves the elementwise epilogue work.
        h1 = jnp.maximum(h1.astype(jnp.bfloat16) + b1_ref[...], 0)
    else:
        h1 = jnp.maximum(h1 + b1_ref[...].astype(jnp.float32), 0.0).astype(jnp.bfloat16)

    h2 = jnp.dot(h1, w2_ref[...], preferred_element_type=jnp.float32)
    if bf16_epilogue:
        h2 = jnp.maximum(h2.astype(jnp.bfloat16) + b2_ref[...], 0)
    else:
        h2 = jnp.maximum(h2 + b2_ref[...].astype(jnp.float32), 0.0).astype(jnp.bfloat16)

    out = jnp.dot(h2, w3_ref[...], preferred_element_type=jnp.float32) + b3_ref[...]
    o_ref[...] = out.astype(o_ref.dtype)


def prepare_params(params):
    """One-time packing: cast weights/biases to bf16 and lane-pad the OUTPUT dim.

    Call once and reuse across forward passes -- re-padding/casting per call
    costs more than the kernel itself at small (MCTS) batch sizes.
    """
    board_dim, hidden = params["w1"].shape
    Dp = _round_up(board_dim, LANE)

    w1 = params["w1"].astype(jnp.bfloat16)                       # (board_dim, hidden), K not padded
    b1 = params["b1"].reshape(1, hidden).astype(jnp.bfloat16)
    w2 = params["w2"].astype(jnp.bfloat16)                       # (hidden, hidden)
    b2 = params["b2"].reshape(1, hidden).astype(jnp.bfloat16)

    w3 = jnp.zeros((hidden, Dp), jnp.bfloat16)                   # output dim lane-padded
    w3 = w3.at[:, :board_dim].set(params["w3"].astype(jnp.bfloat16))
    b3 = jnp.zeros((1, Dp), jnp.float32)                         # final bias kept in f32
    b3 = b3.at[:, :board_dim].set(params["b3"].reshape(1, board_dim).astype(jnp.float32))

    return {
        "w1": w1, "b1": b1, "w2": w2, "b2": b2, "w3": w3, "b3": b3,
        "board_dim": board_dim, "hidden": hidden, "Dp": Dp,
    }


def hex_policy_net(x, packed, *, batch_tile=None, out_dtype=jnp.float32,
                   bf16_epilogue=True, unpad=True):
    """x: (B, board_dim) f32/bf16. packed: output of prepare_params()."""
    B, board_dim = x.shape
    assert board_dim == packed["board_dim"]
    hidden, Dp = packed["hidden"], packed["Dp"]

    # Batch tile: multiple of 16 (bf16 sublane packing). For B > 16 pick a tile
    # that gives the grid >= 2 steps so v7x's second TensorCore gets work via
    # the "parallel" axis; cap at 256 rows (sweep {128, 256, 512} if tuning).
    if batch_tile is None:
        if B <= SUBLANE_BF16:
            batch_tile = SUBLANE_BF16
        else:
            batch_tile = min(256, _round_up(pl.cdiv(B, 2), SUBLANE_BF16))
    batch_tile = max(SUBLANE_BF16, _round_up(batch_tile, SUBLANE_BF16))
    Bp = _round_up(B, batch_tile)
    grid = (Bp // batch_tile,)

    xb = x.astype(jnp.bfloat16)
    if Bp != B:
        xb = jnp.pad(xb, ((0, Bp - B), (0, 0)))  # row pad only; K stays unpadded

    def resident(shape):
        # Full tensor resident across grid steps (weights/biases are small).
        return pl.BlockSpec(shape, lambda i: (0,) * len(shape))

    kernel = functools.partial(_hex_policy_kernel, bf16_epilogue=bf16_epilogue)

    out_p = pl.pallas_call(
        kernel,
        out_shape=jax.ShapeDtypeStruct((Bp, Dp), out_dtype),
        grid_spec=pl.GridSpec(
            grid=grid,
            in_specs=[
                pl.BlockSpec((batch_tile, board_dim), lambda i: (i, 0)),  # x streams
                resident((board_dim, hidden)),   # w1
                resident((1, hidden)),           # b1
                resident((hidden, hidden)),      # w2
                resident((1, hidden)),           # b2
                resident((hidden, Dp)),          # w3 (output dim lane-padded)
                resident((1, Dp)),               # b3
            ],
            out_specs=pl.BlockSpec((batch_tile, Dp), lambda i: (i, 0)),
        ),
        compiler_params=pltpu.CompilerParams(
            dimension_semantics=("parallel",),
            # Actual usage is ~1-2 MiB; 32 MiB is safe on v5e/v6e (128 MiB
            # physical) and v7x (64 MiB physical).
            vmem_limit_bytes=32 * 1024 * 1024,
        ),
    )(xb, packed["w1"], packed["b1"], packed["w2"], packed["b2"],
      packed["w3"], packed["b3"])

    # TODO(synk): for repeated tiny-batch inference (MCTS leaves), keep the
    # packed bf16 weights VMEM-resident across calls (cross-pallas_call future
    # / pl.get_global pattern) or batch many leaves per call — that, not kernel
    # micro-tuning, is the lever at B<=16.

    if unpad:
        # NOTE: the 128 -> board_dim lane slice is an extra non-lane-dense HBM
        # pass; in a hot loop pass unpad=False and slice/mask at the consumer
        # (or keep this inside the same jit so XLA can fuse it).
        return out_p[:B, :board_dim]
    return out_p


def init_params(key, board_dim, hidden=HIDDEN):
    """Deterministic init mimicking nn.Linear default (uniform +/- 1/sqrt(fan_in))."""
    keys = jax.random.split(key, 6)

    def linear(kw, kb, fan_in, fan_out):
        bound = 1.0 / jnp.sqrt(float(fan_in))
        w = jax.random.uniform(kw, (fan_in, fan_out), jnp.float32, -bound, bound)
        b = jax.random.uniform(kb, (1, fan_out), jnp.float32, -bound, bound)
        return w, b

    w1, b1 = linear(keys[0], keys[1], board_dim, hidden)
    w2, b2 = linear(keys[2], keys[3], hidden, hidden)
    w3, b3 = linear(keys[4], keys[5], hidden, board_dim)
    return {"w1": w1, "b1": b1, "w2": w2, "b2": b2, "w3": w3, "b3": b3}


def reference_forward(x, p, bf16_epilogue=True):
    """Same bf16-input / f32-accumulation arithmetic as the kernel.

    Note: bf16 weights/activations are an intentional contract; logits differ
    from an all-f32 PyTorch HexPolicyNet by roughly 1e-2 relative.
    """
    w1 = p["w1"].astype(jnp.bfloat16)
    w2 = p["w2"].astype(jnp.bfloat16)
    w3 = p["w3"].astype(jnp.bfloat16)
    b1 = p["b1"].reshape(1, -1)
    b2 = p["b2"].reshape(1, -1)
    b3 = p["b3"].reshape(1, -1).astype(jnp.float32)

    h1 = jnp.dot(x.astype(jnp.bfloat16), w1, preferred_element_type=jnp.float32)
    if bf16_epilogue:
        h1 = jnp.maximum(h1.astype(jnp.bfloat16) + b1.astype(jnp.bfloat16), 0)
    else:
        h1 = jnp.maximum(h1 + b1.astype(jnp.float32), 0.0).astype(jnp.bfloat16)

    h2 = jnp.dot(h1, w2, preferred_element_type=jnp.float32)
    if bf16_epilogue:
        h2 = jnp.maximum(h2.astype(jnp.bfloat16) + b2.astype(jnp.bfloat16), 0)
    else:
        h2 = jnp.maximum(h2 + b2.astype(jnp.float32), 0.0).astype(jnp.bfloat16)

    return jnp.dot(h2, w3, preferred_element_type=jnp.float32) + b3


if __name__ == "__main__":
    board_size = 8                     # Hex board 8x8 -> board_dim = 64
    board_dim = board_size * board_size
    batch = 8

    key = jax.random.PRNGKey(0)
    k_x, k_p = jax.random.split(key)
    x = jax.random.normal(k_x, (batch, board_dim), jnp.float32)
    params = init_params(k_p, board_dim)

    packed = prepare_params(params)    # one-time weight packing (reuse across calls)

    out = hex_policy_net(x, packed)
    out = jax.block_until_ready(out)

    ref = reference_forward(x, params)
    assert out.shape == (batch, board_dim)
    assert jnp.allclose(out, ref, atol=2e-2, rtol=2e-2), "mismatch vs reference"

    print("KERNEL_OK")
</pallas_src>

<mosaic_0001>
module attributes {stable_mosaic.version = 11 : i64} {
  func.func @_hex_policy_kernel(%arg0: i32, %arg1: memref<16x64xbf16, #tpu.memory_space<vmem>>, %arg2: memref<64x256xbf16, #tpu.memory_space<vmem>>, %arg3: memref<1x256xbf16, #tpu.memory_space<vmem>>, %arg4: memref<256x256xbf16, #tpu.memory_space<vmem>>, %arg5: memref<1x256xbf16, #tpu.memory_space<vmem>>, %arg6: memref<256x128xbf16, #tpu.memory_space<vmem>>, %arg7: memref<1x128xf32, #tpu.memory_space<vmem>>, %arg8: memref<16x128xf32, #tpu.memory_space<vmem>>) attributes {dimension_semantics = [#tpu.dimension_semantics<parallel>], iteration_bounds = array<i64: 1>, scalar_prefetch = 0 : i64, scratch_operands = 0 : i64, tpu.core_type = #tpu.core_type<tc>, window_params = [{transform_indices = @transform_0, window_bounds = array<i64: 16, 64>}, {pipeline_mode = #tpu.pipeline_mode<synchronous>, transform_indices = @transform_1, window_bounds = array<i64: 64, 256>}, {pipeline_mode = #tpu.pipeline_mode<synchronous>, transform_indices = @transform_2, window_bounds = array<i64: 1, 256>}, {pipeline_mode = #tpu.pipeline_mode<synchronous>, transform_indices = @transform_3, window_bounds = array<i64: 256, 256>}, {pipeline_mode = #tpu.pipeline_mode<synchronous>, transform_indices = @transform_4, window_bounds = array<i64: 1, 256>}, {pipeline_mode = #tpu.pipeline_mode<synchronous>, transform_indices = @transform_5, window_bounds = array<i64: 256, 128>}, {pipeline_mode = #tpu.pipeline_mode<synchronous>, transform_indices = @transform_6, window_bounds = array<i64: 1, 128>}, {transform_indices = @transform_7, window_bounds = array<i64: 16, 128>}]} {
    %c0 = arith.constant 0 : index
    %c0_0 = arith.constant 0 : index
    %0 = vector.load %arg1[%c0, %c0_0] : memref<16x64xbf16, #tpu.memory_space<vmem>>, vector<16x64xbf16>
    %c0_1 = arith.constant 0 : index
    %c0_2 = arith.constant 0 : index
    %1 = vector.load %arg2[%c0_1, %c0_2] : memref<64x256xbf16, #tpu.memory_space<vmem>>, vector<64x256xbf16>
    %cst = arith.constant dense<0.000000e+00> : vector<16x256xf32>
    %2 = tpu.matmul %0, %1, %cst {dimension_numbers = #tpu.dot_dimension_numbers<[1], [0], [0], [1], [0, 0, 1, 1], [], []>} : vector<16x64xbf16>, vector<64x256xbf16>, vector<16x256xf32> -> vector<16x256xf32>
    %3 = arith.truncf %2 : vector<16x256xf32> to vector<16x256xbf16>
    %c0_3 = arith.constant 0 : index
    %c0_4 = arith.constant 0 : index
    %4 = vector.load %arg3[%c0_3, %c0_4] : memref<1x256xbf16, #tpu.memory_space<vmem>>, vector<1x256xbf16>
    %5 = vector.broadcast %4 : vector<1x256xbf16> to vector<16x256xbf16>
    %6 = arith.addf %3, %5 : vector<16x256xbf16>
    %cst_5 = arith.constant 0.000000e+00 : bf16
    %7 = vector.broadcast %cst_5 : bf16 to vector<16x256xbf16>
    %8 = arith.maximumf %6, %7 : vector<16x256xbf16>
    %c0_6 = arith.constant 0 : index
    %c0_7 = arith.constant 0 : index
    %9 = vector.load %arg4[%c0_6, %c0_7] : memref<256x256xbf16, #tpu.memory_space<vmem>>, vector<256x256xbf16>
    %cst_8 = arith.constant dense<0.000000e+00> : vector<16x256xf32>
    %10 = tpu.matmul %8, %9, %cst_8 {dimension_numbers = #tpu.dot_dimension_numbers<[1], [0], [0], [1], [0, 0, 1, 1], [], []>} : vector<16x256xbf16>, vector<256x256xbf16>, vector<16x256xf32> -> vector<16x256xf32>
    %11 = arith.truncf %10 : vector<16x256xf32> to vector<16x256xbf16>
    %c0_9 = arith.constant 0 : index
    %c0_10 = arith.constant 0 : index
    %12 = vector.load %arg5[%c0_9, %c0_10] : memref<1x256xbf16, #tpu.memory_space<vmem>>, vector<1x256xbf16>
    %13 = vector.broadcast %12 : vector<1x256xbf16> to vector<16x256xbf16>
    %14 = arith.addf %11, %13 : vector<16x256xbf16>
    %cst_11 = arith.constant 0.000000e+00 : bf16
    %15 = vector.broadcast %cst_11 : bf16 to vector<16x256xbf16>
    %16 = arith.maximumf %14, %15 : vector<16x256xbf16>
    %c0_12 = arith.constant 0 : index
    %c0_13 = arith.constant 0 : index
    %17 = vector.load %arg6[%c0_12, %c0_13] : memref<256x128xbf16, #tpu.memory_space<vmem>>, vector<256x128xbf16>
    %cst_14 = arith.constant dense<0.000000e+00> : vector<16x128xf32>
    %18 = tpu.matmul %16, %17, %cst_14 {dimension_numbers = #tpu.dot_dimension_numbers<[1], [0], [0], [1], [0, 0, 1, 1], [], []>} : vector<16x256xbf16>, vector<256x128xbf16>, vector<16x128xf32> -> vector<16x128xf32>
    %c0_15 = arith.constant 0 : index
    %c0_16 = arith.constant 0 : index
    %19 = vector.load %arg7[%c0_15, %c0_16] : memref<1x128xf32, #tpu.memory_space<vmem>>, vector<1x128xf32>
    %20 = vector.broadcast %19 : vector<1x128xf32> to vector<16x128xf32>
    %21 = arith.addf %18, %20 : vector<16x128xf32>
    %c0_17 = arith.constant 0 : index
    %c0_18 = arith.constant 0 : index
    %22 = vector.load %arg8[%c0_17, %c0_18] : memref<16x128xf32, #tpu.memory_space<vmem>>, vector<16x128xf32>
    tpu.vector_store %arg8[%c0_17, %c0_18], %21 {strides = array<i32>} : memref<16x128xf32, #tpu.memory_space<vmem>>, vector<16x128xf32>,
    return
  }
  func.func @transform_0(%arg0: i32) -> (i32, i32) {
    %c0_i32 = arith.constant 0 : i32
    %c0_i32_0 = arith.constant 0 : i32
    return %arg0, %c0_i32 : i32, i32
  }
  func.func @transform_1(%arg0: i32) -> (i32, i32) {
    %c0_i32 = arith.constant 0 : i32
    %c0_i32_0 = arith.constant 0 : i32
    %c0_i32_1 = arith.constant 0 : i32
    return %c0_i32, %c0_i32_0 : i32, i32
  }
  func.func @transform_2(%arg0: i32) -> (i32, i32) {
    %c0_i32 = arith.constant 0 : i32
    %c0_i32_0 = arith.constant 0 : i32
    %c0_i32_1 = arith.constant 0 : i32
    return %c0_i32, %c0_i32_0 : i32, i32
  }
  func.func @transform_3(%arg0: i32) -> (i32, i32) {
    %c0_i32 = arith.constant 0 : i32
    %c0_i32_0 = arith.constant 0 : i32
    %c0_i32_1 = arith.constant 0 : i32
    return %c0_i32, %c0_i32_0 : i32, i32
  }
  func.func @transform_4(%arg0: i32) -> (i32, i32) {
    %c0_i32 = arith.constant 0 : i32
    %c0_i32_0 = arith.constant 0 : i32
    %c0_i32_1 = arith.constant 0 : i32
    return %c0_i32, %c0_i32_0 : i32, i32
  }
  func.func @transform_5(%arg0: i32) -> (i32, i32) {
    %c0_i32 = arith.constant 0 : i32
    %c0_i32_0 = arith.constant 0 : i32
    %c0_i32_1 = arith.constant 0 : i32
    return %c0_i32, %c0_i32_0 : i32, i32
  }
  func.func @transform_6(%arg0: i32) -> (i32, i32) {
    %c0_i32 = arith.constant 0 : i32
    %c0_i32_0 = arith.constant 0 : i32
    %c0_i32_1 = arith.constant 0 : i32
    return %c0_i32, %c0_i32_0 : i32, i32
  }
  func.func @transform_7(%arg0: i32) -> (i32, i32) {
    %c0_i32 = arith.constant 0 : i32
    %c0_i32_0 = arith.constant 0 : i32
    return %arg0, %c0_i32 : i32, i32
  }
}

</mosaic_0001>

<llo_original>
// kernel: tpu_custom_call.1
$region0: #{tpu_custom_call.1}
  #allocation0 [shape = 'u32[]', space=smem, size = 0x4, offset = 0x4, fixed_abs, tag = 'smem constant byte address 0x4 - core index']
  #allocation1 [shape = 'u32[144,128]{1,0:T(1,128)}', space=vmem, size = 0x12000, scoped, tag = 'internal scratch']
  %s0 = inlined_call_operand.hbm [shape: bf16[16,64], index: 0, kind: input, shape index: {}]
  %s1 = inlined_call_operand.hbm [shape: bf16[64,256], index: 1, kind: input, shape index: {}]
  %s2 = inlined_call_operand.vmem [shape: bf16[1,256], index: 2, kind: input, shape index: {}]
  %s3 = inlined_call_operand.hbm [shape: bf16[256,256], index: 3, kind: input, shape index: {}]
  %s4 = inlined_call_operand.vmem [shape: bf16[1,256], index: 4, kind: input, shape index: {}]
  %s5 = inlined_call_operand.hbm [shape: bf16[256,128], index: 5, kind: input, shape index: {}]
  %s6 = inlined_call_operand.vmem [shape: f32[1,128], index: 6, kind: input, shape index: {}]
  %s7 = inlined_call_operand.hbm [shape: f32[16,128], index: 7, kind: output, shape index: {}]
  %s8 = sld [smem:[#allocation0]]
  $region54: #{tpu_custom_call.1} parent=0
    _
  %s10 = ssub.s32 1, %s8
  %s11 = scalar_select 0, %s10, %s8
  $region1: #{tpu_custom_call.1} parent=0
    #allocation2 [shape = 'u8[4096]{0}', space=vmem, size = 0x1000, scoped, tag = 'input window, operand 0, single buffered']
    #allocation3 [shape = 's32[1]{0}', space=sflag, size = 0x4, scoped, tag = 'scoped memory for tpu_custom_call.1']
    #allocation4 [shape = 's32[1]{0}', space=sflag, size = 0x4, scoped, tag = 'scoped memory for tpu_custom_call.1']
    #allocation5 [shape = 'u8[32768]{0}', space=vmem, size = 0x8000, scoped, tag = 'input window, operand 1, single buffered']
    #allocation6 [shape = 's32[1]{0}', space=sflag, size = 0x4, scoped, tag = 'scoped memory for tpu_custom_call.1']
    #allocation7 [shape = 'u8[131072]{0}', space=vmem, size = 0x20000, scoped, tag = 'input window, operand 3, single buffered']
    #allocation8 [shape = 'u8[65536]{0}', space=vmem, size = 0x10000, scoped, tag = 'input window, operand 5, single buffered']
    #allocation9 [shape = 's32[1]{0}', space=sflag, size = 0x4, scoped, tag = 'scoped memory for tpu_custom_call.1']
    #allocation10 [shape = 'u8[8192]{0}', space=vmem, size = 0x2000, scoped, tag = 'output window, operand 0, single buffered']
    %12 = vsyncpa [#allocation3], 0
    %13 = vsyncpa [#allocation6], 0
    %14 = vsyncpa [#allocation9], 0
    %15 = vsyncpa [#allocation4], 0
    // Predicated region
    $region2: #{tpu_custom_call.1} parent=1 // pred_check
      _
    $region3: #{tpu_custom_call.1} parent=1 // pred_check_branch
      %17 = sbr.rel (0) target = $region5
    $region4: #{tpu_custom_call.1} parent=1 // pred_region
      %s19 = ssub.s32 128, 128
      %20 = vsyncadd [#allocation3], %s19
      %s21 = sshll.u32 [#allocation2], 4
      %s22 = int_to_ptr.vmem [resolvable:$true] %s21
      %27 = dma.hbm_to_vmem [thread:$0]  %s0, 128, %s22, [#allocation3], 64, 64, 4
    $region5: #{tpu_custom_call.1} parent=1 // pred_fallthru
      _
    // Predicated region
    $region6: #{tpu_custom_call.1} parent=1 // pred_check
      _
    $region7: #{tpu_custom_call.1} parent=1 // pred_check_branch
      %29 = sbr.rel (0) target = $region9
    $region8: #{tpu_custom_call.1} parent=1 // pred_region
      %s31 = ssub.s32 1024, 1024
      %32 = vsyncadd [#allocation6], %s31
      %s33 = sshll.u32 [#allocation5], 4
      %s34 = int_to_ptr.vmem [resolvable:$true] %s33
      %39 = dma.hbm_to_vmem [thread:$0]  %s1, 1024, %s34, [#allocation6], 128, 128, 8
    $region9: #{tpu_custom_call.1} parent=1 // pred_fallthru
      _
    // Predicated region
    $region10: #{tpu_custom_call.1} parent=1 // pred_check
      _
    $region11: #{tpu_custom_call.1} parent=1 // pred_check_branch
      %41 = sbr.rel (0) target = $region13
    $region12: #{tpu_custom_call.1} parent=1 // pred_region
      _
    $region13: #{tpu_custom_call.1} parent=1 // pred_fallthru
      _
    // Predicated region
    $region14: #{tpu_custom_call.1} parent=1 // pred_check
      _
    $region15: #{tpu_custom_call.1} parent=1 // pred_check_branch
      %43 = sbr.rel (0) target = $region17
    $region16: #{tpu_custom_call.1} parent=1 // pred_region
      %s45 = ssub.s32 4096, 4096
      %46 = vsyncadd [#allocation6], %s45
      %s47 = sshll.u32 [#allocation7], 4
      %s48 = int_to_ptr.vmem [resolvable:$true] %s47
      %53 = dma.hbm_to_vmem [thread:$0]  %s3, 4096, %s48, [#allocation6], 128, 128, 8
    $region17: #{tpu_custom_call.1} parent=1 // pred_fallthru
      _
    // Predicated region
    $region18: #{tpu_custom_call.1} parent=1 // pred_check
      _
    $region19: #{tpu_custom_call.1} parent=1 // pred_check_branch
      %55 = sbr.rel (0) target = $region21
    $region20: #{tpu_custom_call.1} parent=1 // pred_region
      _
    $region21: #{tpu_custom_call.1} parent=1 // pred_fallthru
      _
    // Predicated region
    $region22: #{tpu_custom_call.1} parent=1 // pred_check
      _
    $region23: #{tpu_custom_call.1} parent=1 // pred_check_branch
      %57 = sbr.rel (0) target = $region25
    $region24: #{tpu_custom_call.1} parent=1 // pred_region
      %s59 = ssub.s32 2048, 2048
      %60 = vsyncadd [#allocation9], %s59
      %s61 = sshll.u32 [#allocation8], 4
      %s62 = int_to_ptr.vmem [resolvable:$true] %s61
      %67 = dma.hbm_to_vmem [thread:$0]  %s5, 2048, %s62, [#allocation9], 64, 64, 4
    $region25: #{tpu_custom_call.1} parent=1 // pred_fallthru
      _
    // Predicated region
    $region26: #{tpu_custom_call.1} parent=1 // pred_check
      _
    $region27: #{tpu_custom_call.1} parent=1 // pred_check_branch
      %69 = sbr.rel (0) target = $region29
    $region28: #{tpu_custom_call.1} parent=1 // pred_region
      _
    $region29: #{tpu_custom_call.1} parent=1 // pred_fallthru
      _
    // Predicated region
    $region30: #{tpu_custom_call.1} parent=1 // pred_check
      _
    $region31: #{tpu_custom_call.1} parent=1 // pred_check_branch
      %71 = sbr.rel (0) target = $region33
    $region32: #{tpu_custom_call.1} parent=1 // pred_region
      %72 = dma.done [#allocation3], 128
    $region33: #{tpu_custom_call.1} parent=1 // pred_fallthru
      _
    // Predicated region
    $region34: #{tpu_custom_call.1} parent=1 // pred_check
      _
    $region35: #{tpu_custom_call.1} parent=1 // pred_check_branch
      %74 = sbr.rel (0) target = $region37
    $region36: #{tpu_custom_call.1} parent=1 // pred_region
      %75 = dma.done [#allocation6], 1024
    $region37: #{tpu_custom_call.1} parent=1 // pred_fallthru
      _
    // Predicated region
    $region38: #{tpu_custom_call.1} parent=1 // pred_check
      _
    $region39: #{tpu_custom_call.1} parent=1 // pred_check_branch
      %77 = sbr.rel (0) target = $region41
    $region40: #{tpu_custom_call.1} parent=1 // pred_region
      %78 = dma.done [#allocation6], 4096
    $region41: #{tpu_custom_call.1} parent=1 // pred_fallthru
      _
    // Predicated region
    $region42: #{tpu_custom_call.1} parent=1 // pred_check
      _
    $region43: #{tpu_custom_call.1} parent=1 // pred_check_branch
      %80 = sbr.rel (0) target = $region45
    $region44: #{tpu_custom_call.1} parent=1 // pred_region
      %81 = dma.done [#allocation9], 2048
    $region45: #{tpu_custom_call.1} parent=1 // pred_fallthru
      _
    %v83 = vld [vmem:[#allocation2] sm:$0xf]
    %v84 = vld [vmem:[#allocation2 + $0x4] sm:$0xf]
    %v85 = vld [vmem:[#allocation5] sm:$0xff]
    %v86 = vld [vmem:[#allocation5 + $0x8] sm:$0xff]
    %v87 = vld [vmem:[#allocation5 + $0x10] sm:$0xff]
    %v88 = vld [vmem:[#allocation5 + $0x18] sm:$0xff]
    %v89 = vld [vmem:[#allocation5 + $0x20] sm:$0xff]
    %v90 = vld [vmem:[#allocation5 + $0x28] sm:$0xff]
    %v91 = vld [vmem:[#allocation5 + $0x30] sm:$0xff]
    %v92 = vld [vmem:[#allocation5 + $0x38] sm:$0xff]
    %v95 = vunpack.c.l.b16 %v83
    %v96 = vunpack.c.l.b16 %v84
    %v97 = vpack.c.b16 %v96, %v95
    %v106 = vunpack.c.l.b16 %v85
    %v107 = vunpack.c.h.b16 %v85
    %v108 = vunpack.c.l.b16 %v86
    %v109 = vunpack.c.h.b16 %v86
    %v110 = vunpack.c.l.b16 %v87
    %v111 = vunpack.c.h.b16 %v87
    %v112 = vunpack.c.l.b16 %v88
    %v113 = vunpack.c.h.b16 %v88
    %v114 = vunpack.c.l.b16 %v89
    %v115 = vunpack.c.h.b16 %v89
    %v116 = vunpack.c.l.b16 %v90
    %v117 = vunpack.c.h.b16 %v90
    %v118 = vunpack.c.l.b16 %v91
    %v119 = vunpack.c.h.b16 %v91
    %v120 = vunpack.c.l.b16 %v92
    %v121 = vunpack.c.h.b16 %v92
    %v122 = vpack.c.b16 %v108, %v106
    %v123 = vpack.c.b16 %v109, %v107
    %v124 = vpack.c.b16 %v112, %v110
    %v125 = vpack.c.b16 %v113, %v111
    %v126 = vpack.c.b16 %v116, %v114
    %v127 = vpack.c.b16 %v117, %v115
    %v128 = vpack.c.b16 %v120, %v118
    %v129 = vpack.c.b16 %v121, %v119
    %vm138 = vcmask 523264
    %v140 = vsel %vm138, %v97, 0
    %142 = vmatprep.subr.bf16.mxu0 %v123
    %143 = vmatpush1.bf16.msra.mxu0 %v122
    %144 = vmatprep.subr.bf16.mxu0 %v125
    %145 = vmatpush1.bf16.msra.mxu0 %v124
    %146 = vmatprep.subr.bf16.mxu0 %v127
    %147 = vmatpush1.bf16.msra.mxu0 %v126
    %148 = vmatprep.subr.bf16.mxu0 %v129
    %149 = vmatpush1.bf16.msra.mxu0 %v128
    %150 = vmatprep.subr.bf16.mxu0 0
    %151 = vmatpush1.bf16.msra.mxu0 0
    %152 = vmatprep.subr.bf16.mxu0 0
    %153 = vmatpush1.bf16.msra.mxu0 0
    %154 = vmatprep.subr.bf16.mxu0 0
    %155 = vmatpush1.bf16.msra.mxu0 0
    %156 = vmatprep.subr.bf16.mxu0 0
    %157 = vmatpush1.bf16.msra.mxu0 0
    %158 = vmatprep.subr.bf16.mxu0 0
    %159 = vmatpush1.bf16.msra.mxu0 0
    %160 = vmatprep.subr.bf16.mxu0 0
    %161 = vmatpush1.bf16.msra.mxu0 0
    %162 = vmatprep.subr.bf16.mxu0 0
    %163 = vmatpush1.bf16.msra.mxu0 0
    %164 = vmatprep.subr.bf16.mxu0 0
    %165 = vmatpush1.bf16.msra.mxu0 0
    %166 = vmatprep.subr.bf16.mxu0 0
    %167 = vmatpush1.bf16.msra.mxu0 0
    %168 = vmatprep.subr.bf16.mxu0 0
    %169 = vmatpush1.bf16.msra.mxu0 0
    %170 = vmatprep.subr.bf16.mxu0 0
    %171 = vmatpush1.bf16.msra.mxu0 0
    %172 = vmatprep.subr.bf16.mxu0 0
    %173 = vmatpush1.bf16.msra.mxu0 0
    %174 = vmatprep.mubr.bf16.mxu0 0
    %175 = vmatmul.mubr.bf16.gmra.mrb[0].mxu0 %v140
    %v176 = vpop.f32.mrb[0].mxu0
    %v177 = vadd.f32 0.0, %v176
    %v178 = vpop.f32.mrb[0].mxu0
    %v179 = vadd.f32 0.0, %v178
    %v180 = vpop.f32.mrb[0].mxu0
    %v181 = vadd.f32 0.0, %v180
    %v182 = vpop.f32.mrb[0].mxu0
    %v183 = vadd.f32 0.0, %v182
    %184 = vdwg.mxu0
    %v185 = vpack.c.bf16 %v181, %v177
    %v186 = vpack.c.bf16 %v183, %v179
    %v187 = vld [vmem:[%s2] sm:$0x3]
    %v190 = vunpack.c.l.s4 1966171168
    %v191 = vunpack.c.0.s8 %v190
    %v192 = vlaneseq
    %v193 = vshrl.u32 %v192, 7
    %v194 = vsub.s32 %v191, %v193
    %v195 = vrot.slane %v187, %v194
    %v196 = vcombine.high %v195, %v195
    %v198 = vunpack.c.l.s4 1966171168
    %v199 = vunpack.c.0.s8 %v198
    %v200 = vlaneseq
    %v201 = vshrl.u32 %v200, 7
    %v202 = vsub.s32 %v199, %v201
    %v203 = vrot.slane %v195, %v202
    %v205 = vunpack.c.l.s4 1966171168
    %v206 = vunpack.c.0.s8 %v205
    %v207 = vlaneseq
    %v208 = vshrl.u32 %v207, 7
    %v209 = vsub.s32 %v206, %v208
    %v210 = vrot.slane %v196, %v209
    %v212 = vpack.i.b16 %v203, %v203
    %v214 = vlaneseq
    %v215 = vshrl.u32 %v214, 7
    %v216 = vsub.s32 0, %v215
    %v217 = vrot.slane %v212, %v216
    %v219 = vpack.i.b16 %v210, %v210
    %v221 = vlaneseq
    %v222 = vshrl.u32 %v221, 7
    %v223 = vsub.s32 0, %v222
    %v224 = vrot.slane %v219, %v223
    %v225 = vadd.bf16 %v185, %v217
    %v226 = vadd.bf16 %v186, %v224
    %v227 = vmax.bf16 %v225, 0
    %v228 = vmax.bf16 %v226, 0
    %v229 = vld [vmem:[#allocation7] sm:$0xff]
    %v230 = vld [vmem:[#allocation7 + $0x8] sm:$0xff]
    %v231 = vld [vmem:[#allocation7 + $0x10] sm:$0xff]
    %v232 = vld [vmem:[#allocation7 + $0x18] sm:$0xff]
    %v233 = vld [vmem:[#allocation7 + $0x20] sm:$0xff]
    %v234 = vld [vmem:[#allocation7 + $0x28] sm:$0xff]
    %v235 = vld [vmem:[#allocation7 + $0x30] sm:$0xff]
    %v236 = vld [vmem:[#allocation7 + $0x38] sm:$0xff]
    %v237 = vld [vmem:[#allocation7 + $0x40] sm:$0xff]
    %v238 = vld [vmem:[#allocation7 + $0x48] sm:$0xff]
    %v239 = vld [vmem:[#allocation7 + $0x50] sm:$0xff]
    %v240 = vld [vmem:[#allocation7 + $0x58] sm:$0xff]
    %v241 = vld [vmem:[#allocation7 + $0x60] sm:$0xff]
    %v242 = vld [vmem:[#allocation7 + $0x68] sm:$0xff]
    %v243 = vld [vmem:[#allocation7 + $0x70] sm:$0xff]
    %v244 = vld [vmem:[#allocation7 + $0x78] sm:$0xff]
    %v245 = vld [vmem:[#allocation7 + $0x80] sm:$0xff]
    %v246 = vld [vmem:[#allocation7 + $0x88] sm:$0xff]
    %v247 = vld [vmem:[#allocation7 + $0x90] sm:$0xff]
    %v248 = vld [vmem:[#allocation7 + $0x98] sm:$0xff]
    %v249 = vld [vmem:[#allocation7 + $0xa0] sm:$0xff]
    %v250 = vld [vmem:[#allocation7 + $0xa8] sm:$0xff]
    %v251 = vld [vmem:[#allocation7 + $0xb0] sm:$0xff]
    %v252 = vld [vmem:[#allocation7 + $0xb8] sm:$0xff]
    %v253 = vld [vmem:[#allocation7 + $0xc0] sm:$0xff]
    %v254 = vld [vmem:[#allocation7 + $0xc8] sm:$0xff]
    %v255 = vld [vmem:[#allocation7 + $0xd0] sm:$0xff]
    %v256 = vld [vmem:[#allocation7 + $0xd8] sm:$0xff]
    %v257 = vld [vmem:[#allocation7 + $0xe0] sm:$0xff]
    %v258 = vld [vmem:[#allocation7 + $0xe8] sm:$0xff]
    %v259 = vld [vmem:[#allocation7 + $0xf0] sm:$0xff]
    %v260 = vld [vmem:[#allocation7 + $0xf8] sm:$0xff]
    %v293 = vunpack.c.l.b16 %v229
    %v294 = vunpack.c.h.b16 %v229
    %v295 = vunpack.c.l.b16 %v230
    %v296 = vunpack.c.h.b16 %v230
    %v297 = vunpack.c.l.b16 %v231
    %v298 = vunpack.c.h.b16 %v231
    %v299 = vunpack.c.l.b16 %v232
    %v300 = vunpack.c.h.b16 %v232
    %v301 = vunpack.c.l.b16 %v233
    %v302 = vunpack.c.h.b16 %v233
    %v303 = vunpack.c.l.b16 %v234
    %v304 = vunpack.c.h.b16 %v234
    %v305 = vunpack.c.l.b16 %v235
    %v306 = vunpack.c.h.b16 %v235
    %v307 = vunpack.c.l.b16 %v236
    %v308 = vunpack.c.h.b16 %v236
    %v309 = vunpack.c.l.b16 %v237
    %v310 = vunpack.c.h.b16 %v237
    %v311 = vunpack.c.l.b16 %v238
    %v312 = vunpack.c.h.b16 %v238
    %v313 = vunpack.c.l.b16 %v239
    %v314 = vunpack.c.h.b16 %v239
    %v315 = vunpack.c.l.b16 %v240
    %v316 = vunpack.c.h.b16 %v240
    %v317 = vunpack.c.l.b16 %v241
    %v318 = vunpack.c.h.b16 %v241
    %v319 = vunpack.c.l.b16 %v242
    %v320 = vunpack.c.h.b16 %v242
    %v321 = vunpack.c.l.b16 %v243
    %v322 = vunpack.c.h.b16 %v243
    %v323 = vunpack.c.l.b16 %v244
    %v324 = vunpack.c.h.b16 %v244
    %v325 = vunpack.c.l.b16 %v245
    %v326 = vunpack.c.h.b16 %v245
    %v327 = vunpack.c.l.b16 %v246
    %v328 = vunpack.c.h.b16 %v246
    %v329 = vunpack.c.l.b16 %v247
    %v330 = vunpack.c.h.b16 %v247
    %v331 = vunpack.c.l.b16 %v248
    %v332 = vunpack.c.h.b16 %v248
    %v333 = vunpack.c.l.b16 %v249
    %v334 = vunpack.c.h.b16 %v249
    %v335 = vunpack.c.l.b16 %v250
    %v336 = vunpack.c.h.b16 %v250
    %v337 = vunpack.c.l.b16 %v251
    %v338 = vunpack.c.h.b16 %v251
    %v339 = vunpack.c.l.b16 %v252
    %v340 = vunpack.c.h.b16 %v252
    %v341 = vunpack.c.l.b16 %v253
    %v342 = vunpack.c.h.b16 %v253
    %v343 = vunpack.c.l.b16 %v254
    %v344 = vunpack.c.h.b16 %v254
    %v345 = vunpack.c.l.b16 %v255
    %v346 = vunpack.c.h.b16 %v255
    %v347 = vunpack.c.l.b16 %v256
    %v348 = vunpack.c.h.b16 %v256
    %v349 = vunpack.c.l.b16 %v257
    %v350 = vunpack.c.h.b16 %v257
    %v351 = vunpack.c.l.b16 %v258
    %v352 = vunpack.c.h.b16 %v258
    %v353 = vunpack.c.l.b16 %v259
    %v354 = vunpack.c.h.b16 %v259
    %v355 = vunpack.c.l.b16 %v260
    %v356 = vunpack.c.h.b16 %v260
    %v357 = vpack.c.b16 %v295, %v293
    %v358 = vpack.c.b16 %v296, %v294
    %v359 = vpack.c.b16 %v299, %v297
    %v360 = vpack.c.b16 %v300, %v298
    %v361 = vpack.c.b16 %v303, %v301
    %v362 = vpack.c.b16 %v304, %v302
    %v363 = vpack.c.b16 %v307, %v305
    %v364 = vpack.c.b16 %v308, %v306
    %v365 = vpack.c.b16 %v311, %v309
    %v366 = vpack.c.b16 %v312, %v310
    %v367 = vpack.c.b16 %v315, %v313
    %v368 = vpack.c.b16 %v316, %v314
    %v369 = vpack.c.b16 %v319, %v317
    %v370 = vpack.c.b16 %v320, %v318
    %v371 = vpack.c.b16 %v323, %v321
    %v372 = vpack.c.b16 %v324, %v322
    %v373 = vpack.c.b16 %v327, %v325
    %v374 = vpack.c.b16 %v328, %v326
    %v375 = vpack.c.b16 %v331, %v329
    %v376 = vpack.c.b16 %v332, %v330
    %v377 = vpack.c.b16 %v335, %v333
    %v378 = vpack.c.b16 %v336, %v334
    %v379 = vpack.c.b16 %v339, %v337
    %v380 = vpack.c.b16 %v340, %v338
    %v381 = vpack.c.b16 %v343, %v341
    %v382 = vpack.c.b16 %v344, %v342
    %v383 = vpack.c.b16 %v347, %v345
    %v384 = vpack.c.b16 %v348, %v346
    %v385 = vpack.c.b16 %v351, %v349
    %v386 = vpack.c.b16 %v352, %v350
    %v387 = vpack.c.b16 %v355, %v353
    %v388 = vpack.c.b16 %v356, %v354
    %421 = vmatprep.subr.bf16.mxu0 %v358
    %422 = vmatpush1.bf16.msra.mxu0 %v357
    %423 = vmatprep.subr.bf16.mxu0 %v360
    %424 = vmatpush1.bf16.msra.mxu0 %v359
    %425 = vmatprep.subr.bf16.mxu0 %v362
    %426 = vmatpush1.bf16.msra.mxu0 %v361
    %427 = vmatprep.subr.bf16.mxu0 %v364
    %428 = vmatpush1.bf16.msra.mxu0 %v363
    %429 = vmatprep.subr.bf16.mxu0 %v366
    %430 = vmatpush1.bf16.msra.mxu0 %v365
    %431 = vmatprep.subr.bf16.mxu0 %v368
    %432 = vmatpush1.bf16.msra.mxu0 %v367
    %433 = vmatprep.subr.bf16.mxu0 %v370
    %434 = vmatpush1.bf16.msra.mxu0 %v369
    %435 = vmatprep.subr.bf16.mxu0 %v372
    %436 = vmatpush1.bf16.msra.mxu0 %v371
    %437 = vmatprep.subr.bf16.mxu0 %v374
    %438 = vmatpush1.bf16.msra.mxu0 %v373
    %439 = vmatprep.subr.bf16.mxu0 %v376
    %440 = vmatpush1.bf16.msra.mxu0 %v375
    %441 = vmatprep.subr.bf16.mxu0 %v378
    %442 = vmatpush1.bf16.msra.mxu0 %v377
    %443 = vmatprep.subr.bf16.mxu0 %v380
    %444 = vmatpush1.bf16.msra.mxu0 %v379
    %445 = vmatprep.subr.bf16.mxu0 %v382
    %446 = vmatpush1.bf16.msra.mxu0 %v381
    %447 = vmatprep.subr.bf16.mxu0 %v384
    %448 = vmatpush1.bf16.msra.mxu0 %v383
    %449 = vmatprep.subr.bf16.mxu0 %v386
    %450 = vmatpush1.bf16.msra.mxu0 %v385
    %451 = vmatprep.subr.bf16.mxu0 %v388
    %452 = vmatpush1.bf16.msra.mxu0 %v387
    %453 = vmatprep.mubr.bf16.mxu0 %v228
    %454 = vmatmul.mubr.bf16.gmra.mrb[0].mxu0 %v227
    %v455 = vpop.f32.mrb[0].mxu0
    %v456 = vadd.f32 0.0, %v455
    %v457 = vpop.f32.mrb[0].mxu0
    %v458 = vadd.f32 0.0, %v457
    %v459 = vpop.f32.mrb[0].mxu0
    %v460 = vadd.f32 0.0, %v459
    %v461 = vpop.f32.mrb[0].mxu0
    %v462 = vadd.f32 0.0, %v461
    %463 = vdwg.mxu0
    %v464 = vpack.c.bf16 %v460, %v456
    %v465 = vpack.c.bf16 %v462, %v458
    %v466 = vld [vmem:[%s4] sm:$0x3]
    %v469 = vunpack.c.l.s4 1966171168
    %v470 = vunpack.c.0.s8 %v469
    %v471 = vlaneseq
    %v472 = vshrl.u32 %v471, 7
    %v473 = vsub.s32 %v470, %v472
    %v474 = vrot.slane %v466, %v473
    %v475 = vcombine.high %v474, %v474
    %v477 = vunpack.c.l.s4 1966171168
    %v478 = vunpack.c.0.s8 %v477
    %v479 = vlaneseq
    %v480 = vshrl.u32 %v479, 7
    %v481 = vsub.s32 %v478, %v480
    %v482 = vrot.slane %v474, %v481
    %v484 = vunpack.c.l.s4 1966171168
    %v485 = vunpack.c.0.s8 %v484
    %v486 = vlaneseq
    %v487 = vshrl.u32 %v486, 7
    %v488 = vsub.s32 %v485, %v487
    %v489 = vrot.slane %v475, %v488
    %v491 = vpack.i.b16 %v482, %v482
    %v493 = vlaneseq
    %v494 = vshrl.u32 %v493, 7
    %v495 = vsub.s32 0, %v494
    %v496 = vrot.slane %v491, %v495
    %v498 = vpack.i.b16 %v489, %v489
    %v500 = vlaneseq
    %v501 = vshrl.u32 %v500, 7
    %v502 = vsub.s32 0, %v501
    %v503 = vrot.slane %v498, %v502
    %v504 = vadd.bf16 %v464, %v496
    %v505 = vadd.bf16 %v465, %v503
    %v506 = vmax.bf16 %v504, 0
    %v507 = vmax.bf16 %v505, 0
    %v508 = vld [vmem:[#allocation8] sm:$0xf]
    %v509 = vld [vmem:[#allocation8 + $0x4] sm:$0xf]
    %v510 = vld [vmem:[#allocation8 + $0x8] sm:$0xf]
    %v511 = vld [vmem:[#allocation8 + $0xc] sm:$0xf]
    %v512 = vld [vmem:[#allocation8 + $0x10] sm:$0xf]
    %v513 = vld [vmem:[#allocation8 + $0x14] sm:$0xf]
    %v514 = vld [vmem:[#allocation8 + $0x18] sm:$0xf]
    %v515 = vld [vmem:[#allocation8 + $0x1c] sm:$0xf]
    %v516 = vld [vmem:[#allocation8 + $0x20] sm:$0xf]
    %v517 = vld [vmem:[#allocation8 + $0x24] sm:$0xf]
    %v518 = vld [vmem:[#allocation8 + $0x28] sm:$0xf]
    %v519 = vld [vmem:[#allocation8 + $0x2c] sm:$0xf]
    %v520 = vld [vmem:[#allocation8 + $0x30] sm:$0xf]
    %v521 = vld [vmem:[#allocation8 + $0x34] sm:$0xf]
    %v522 = vld [vmem:[#allocation8 + $0x38] sm:$0xf]
    %v523 = vld [vmem:[#allocation8 + $0x3c] sm:$0xf]
    %v524 = vld [vmem:[#allocation8 + $0x40] sm:$0xf]
    %v525 = vld [vmem:[#allocation8 + $0x44] sm:$0xf]
    %v526 = vld [vmem:[#allocation8 + $0x48] sm:$0xf]
    %v527 = vld [vmem:[#allocation8 + $0x4c] sm:$0xf]
    %v528 = vld [vmem:[#allocation8 + $0x50] sm:$0xf]
    %v529 = vld [vmem:[#allocation8 + $0x54] sm:$0xf]
    %v530 = vld [vmem:[#allocation8 + $0x58] sm:$0xf]
    %v531 = vld [vmem:[#allocation8 + $0x5c] sm:$0xf]
    %v532 = vld [vmem:[#allocation8 + $0x60] sm:$0xf]
    %v533 = vld [vmem:[#allocation8 + $0x64] sm:$0xf]
    %v534 = vld [vmem:[#allocation8 + $0x68] sm:$0xf]
    %v535 = vld [vmem:[#allocation8 + $0x6c] sm:$0xf]
    %v536 = vld [vmem:[#allocation8 + $0x70] sm:$0xf]
    %v537 = vld [vmem:[#allocation8 + $0x74] sm:$0xf]
    %v538 = vld [vmem:[#allocation8 + $0x78] sm:$0xf]
    %v539 = vld [vmem:[#allocation8 + $0x7c] sm:$0xf]
    %v540 = vld [vmem:[%s6] sm:$0x1]
    %v542 = vlaneseq
    %v543 = vshrl.u32 %v542, 7
    %v544 = vsub.s32 0, %v543
    %v545 = vrot.slane %v540, %v544
    %v579 = vunpack.c.l.b16 %v508
    %v580 = vunpack.c.l.b16 %v509
    %v581 = vunpack.c.l.b16 %v510
    %v582 = vunpack.c.l.b16 %v511
    %v583 = vunpack.c.l.b16 %v512
    %v584 = vunpack.c.l.b16 %v513
    %v585 = vunpack.c.l.b16 %v514
    %v586 = vunpack.c.l.b16 %v515
    %v587 = vunpack.c.l.b16 %v516
    %v588 = vunpack.c.l.b16 %v517
    %v589 = vunpack.c.l.b16 %v518
    %v590 = vunpack.c.l.b16 %v519
    %v591 = vunpack.c.l.b16 %v520
    %v592 = vunpack.c.l.b16 %v521
    %v593 = vunpack.c.l.b16 %v522
    %v594 = vunpack.c.l.b16 %v523
    %v595 = vunpack.c.l.b16 %v524
    %v596 = vunpack.c.l.b16 %v525
    %v597 = vunpack.c.l.b16 %v526
    %v598 = vunpack.c.l.b16 %v527
    %v599 = vunpack.c.l.b16 %v528
    %v600 = vunpack.c.l.b16 %v529
    %v601 = vunpack.c.l.b16 %v530
    %v602 = vunpack.c.l.b16 %v531
    %v603 = vunpack.c.l.b16 %v532
    %v604 = vunpack.c.l.b16 %v533
    %v605 = vunpack.c.l.b16 %v534
    %v606 = vunpack.c.l.b16 %v535
    %v607 = vunpack.c.l.b16 %v536
    %v608 = vunpack.c.l.b16 %v537
    %v609 = vunpack.c.l.b16 %v538
    %v610 = vunpack.c.l.b16 %v539
    %v611 = vpack.c.b16 %v580, %v579
    %v612 = vpack.c.b16 %v582, %v581
    %v613 = vpack.c.b16 %v584, %v583
    %v614 = vpack.c.b16 %v586, %v585
    %v615 = vpack.c.b16 %v588, %v587
    %v616 = vpack.c.b16 %v590, %v589
    %v617 = vpack.c.b16 %v592, %v591
    %v618 = vpack.c.b16 %v594, %v593
    %v619 = vpack.c.b16 %v596, %v595
    %v620 = vpack.c.b16 %v598, %v597
    %v621 = vpack.c.b16 %v600, %v599
    %v622 = vpack.c.b16 %v602, %v601
    %v623 = vpack.c.b16 %v604, %v603
    %v624 = vpack.c.b16 %v606, %v605
    %v625 = vpack.c.b16 %v608, %v607
    %v626 = vpack.c.b16 %v610, %v609
    %643 = vmatprep.subr.bf16.mxu0 0
    %644 = vmatpush1.bf16.msra.mxu0 %v611
    %645 = vmatprep.subr.bf16.mxu0 0
    %646 = vmatpush1.bf16.msra.mxu0 %v612
    %647 = vmatprep.subr.bf16.mxu0 0
    %648 = vmatpush1.bf16.msra.mxu0 %v613
    %649 = vmatprep.subr.bf16.mxu0 0
    %650 = vmatpush1.bf16.msra.mxu0 %v614
    %651 = vmatprep.subr.bf16.mxu0 0
    %652 = vmatpush1.bf16.msra.mxu0 %v615
    %653 = vmatprep.subr.bf16.mxu0 0
    %654 = vmatpush1.bf16.msra.mxu0 %v616
    %655 = vmatprep.subr.bf16.mxu0 0
    %656 = vmatpush1.bf16.msra.mxu0 %v617
    %657 = vmatprep.subr.bf16.mxu0 0
    %658 = vmatpush1.bf16.msra.mxu0 %v618
    %659 = vmatprep.subr.bf16.mxu0 0
    %660 = vmatpush1.bf16.msra.mxu0 %v619
    %661 = vmatprep.subr.bf16.mxu0 0
    %662 = vmatpush1.bf16.msra.mxu0 %v620
    %663 = vmatprep.subr.bf16.mxu0 0
    %664 = vmatpush1.bf16.msra.mxu0 %v621
    %665 = vmatprep.subr.bf16.mxu0 0
    %666 = vmatpush1.bf16.msra.mxu0 %v622
    %667 = vmatprep.subr.bf16.mxu0 0
    %668 = vmatpush1.bf16.msra.mxu0 %v623
    %669 = vmatprep.subr.bf16.mxu0 0
    %670 = vmatpush1.bf16.msra.mxu0 %v624
    %671 = vmatprep.subr.bf16.mxu0 0
    %672 = vmatpush1.bf16.msra.mxu0 %v625
    %673 = vmatprep.subr.bf16.mxu0 0
    %674 = vmatpush1.bf16.msra.mxu0 %v626
    %675 = vmatprep.mubr.bf16.mxu0 %v507
    %676 = vmatmul.mubr.bf16.gmra.mrb[0].mxu0 %v506
    %v677 = vpop.f32.mrb[0].mxu0
    %v678 = vadd.f32 %v545, %v677
    %v679 = vpop.f32.mrb[0].mxu0
    %v680 = vpop.f32.mrb[0].mxu0
    %v681 = vadd.f32 %v545, %v680
    %v682 = vpop.f32.mrb[0].mxu0
    %683 = vdwg.mxu0
    %684 = vst [vmem:[#allocation10] sm:$0xff] %v678
    %685 = vst [vmem:[#allocation10 + $0x8] sm:$0xff] %v681
    // Predicated region
    $region46: #{tpu_custom_call.1} parent=1 // pred_check
      _
    $region47: #{tpu_custom_call.1} parent=1 // pred_check_branch
      %687 = sbr.rel (0) target = $region49
    $region48: #{tpu_custom_call.1} parent=1 // pred_region
      %s689 = ssub.s32 256, 256
      %690 = vsyncadd [#allocation4], %s689
      %s691 = sshll.u32 [#allocation10], 4
      %s692 = int_to_ptr.vmem [resolvable:$true] %s691
      %697 = dma.vmem_to_hbm [thread:$0]  %s692, 256, %s7, [#allocation4], 128, 128, 8
    $region49: #{tpu_custom_call.1} parent=1 // pred_fallthru
      _
    // Predicated region
    $region50: #{tpu_custom_call.1} parent=1 // pred_check
      _
    $region51: #{tpu_custom_call.1} parent=1 // pred_check_branch
      %699 = sbr.rel (0) target = $region53
    $region52: #{tpu_custom_call.1} parent=1 // pred_region
      %700 = dma.done [#allocation4], 256
    $region53: #{tpu_custom_call.1} parent=1 // pred_fallthru
      _
    %701 = vsyncpa [#allocation3], 1
    %702 = vsyncpa [#allocation6], 1
    %703 = vsyncpa [#allocation9], 1
    %704 = vsyncpa [#allocation4], 1

</llo_original>
